<compile_context>
chip_gen: v7x
topology: tpu7x:2x2x1
jax: 0.10.0
libtpu: 0.0.40
codegen_flags: <defaults>
</compile_context>

<pallas_src>
import jax
import jax.numpy as jnp
from jax.experimental import pallas as pl
from jax.experimental.pallas import tpu as pltpu


def _round_up(a, b):
    return ((a + b - 1) // b) * b


def classifier_kernel(x_ref, w1_ref, b1_ref, v_ref, c_ref, o_ref):
    """Fused per-tile forward: Linear -> ReLU -> (folded Linear + fc) -> sigmoid.

    x_ref : (tile_r, P*in_f)      VMEM (f32 or bf16), streamed tiles
    w1_ref: (P*in_f, P*hidden)    VMEM, resident (block-diagonal w1)
    b1_ref: (1, P*hidden)         VMEM f32, resident (tiled b1)
    v_ref : (P*hidden, P)         VMEM, resident (block-diagonal w2 @ wf)
    c_ref : (1, 1)                SMEM f32 (folded scalar bias b2 @ wf + bf)
    o_ref : (tile_r, P)
    """
    # encoder layer 1, P batch rows per sublane row: MXU matmul, f32 accumulate,
    # bias + ReLU on the VPU (kept in f32 even on the bf16 path; v5e-safe).
    h = jnp.dot(x_ref[...], w1_ref[...], preferred_element_type=jnp.float32)
    h = jnp.maximum(h + b1_ref[...], 0.0)

    # folded encoder[-1] + fc head: a grouped (hidden -> 1) projection for each
    # of the P packed rows, done as one MXU matmul with block-diagonal V'.
    logits = jnp.dot(h.astype(v_ref.dtype), v_ref[...],
                     preferred_element_type=jnp.float32) + c_ref[0, 0]

    # sigmoid on the EUP (f32), cast to output dtype.  (EUP has slack here, so
    # the exp + approx-reciprocal micro-opt is not needed.)
    o_ref[...] = jax.nn.sigmoid(logits).astype(o_ref.dtype)


def classifier_forward(x, params, *, tile_b=32768, compute_dtype=None):
    """Forward pass of Classifier.  x: (N, in_features) -> (N, 1) in (0, 1).

    tile_b:        batch rows per grid step (auto-shrunk so the grid has >= 4
                   steps when possible and the tile fits VMEM on v7x).
    compute_dtype: optional dtype (e.g. jnp.bfloat16) for the matmul operands
                   (x, W1', V').  Accumulation / bias / ReLU / sigmoid stay f32.
    """
    w1, b1, w2, b2, wf, bf = params
    n, in_f = x.shape
    hidden = w1.shape[1]
    out_dtype = x.dtype

    # ---- row-packing factor: P rows share one (up to 256-)lane row ------------
    pack = 256 // in_f if (in_f <= 256 and 256 % in_f == 0) else 1

    # ---- fold fc into encoder[-1] (exact: no nonlinearity in between) ---------
    # logit = (h @ w2 + b2) @ wf + bf = h @ (w2 @ wf) + (b2 @ wf + bf)
    v = (w2 @ wf).astype(jnp.float32)                          # (hidden, 1)
    c = (b2 @ wf + bf).reshape(1, 1).astype(jnp.float32)       # scalar (SMEM)

    # ---- expand weights to block-diagonal packed form (trace-time, tiny) ------
    eye = jnp.eye(pack, dtype=jnp.float32)
    w1p = jnp.kron(eye, w1.astype(jnp.float32))                # (P*in_f, P*hidden)
    b1p = jnp.tile(b1.astype(jnp.float32), (1, pack))          # (1, P*hidden)
    vp = jnp.kron(eye, v)                                      # (P*hidden, P)

    # ---- pack P batch rows per lane row (contiguous reshape: no HBM copy) -----
    if n % pack:
        # Rare tail case only; prefer batch sizes that are multiples of `pack`
        # so this whole-array pad copy never happens.
        x = jnp.pad(x, ((0, pack - n % pack), (0, 0)))
    x_packed = x.reshape(-1, pack * in_f)
    n_pack = x_packed.shape[0]

    # ---- optional reduced-precision matmul operands ---------------------------
    if compute_dtype is not None:
        x_packed = x_packed.astype(compute_dtype)  # fused in via allow_input_fusion
        w1p = w1p.astype(compute_dtype)
        vp = vp.astype(compute_dtype)

    # ---- batch tiling: big tiles, >=4 grid steps, VMEM-bounded, OOB tail ------
    bytes_per_row = pack * in_f * x_packed.dtype.itemsize
    max_rows_vmem = max(8, (8 * 1024 * 1024 // bytes_per_row) // 8 * 8)  # <=8 MiB / x buffer
    tile_r = max(1, int(tile_b) // pack)                       # requested (packed rows)
    tile_r = min(tile_r, _round_up(pl.cdiv(n_pack, 4), 8))     # keep >= 4 grid steps
    tile_r = max(8, _round_up(tile_r, 8))                      # sublane-aligned
    tile_r = min(tile_r, max_rows_vmem)                        # v7x 64 MiB VMEM safe
    tile_r = min(tile_r, n_pack)                               # single-block case
    num_tiles = pl.cdiv(n_pack, tile_r)                        # last block may run OOB

    kp = pack * in_f
    nh = pack * hidden

    out = pl.pallas_call(
        classifier_kernel,
        out_shape=jax.ShapeDtypeStruct((num_tiles * tile_r, pack), out_dtype),
        grid=(num_tiles,),
        in_specs=[
            pl.BlockSpec((tile_r, kp), lambda i: (i, 0)),        # x : streamed tiles
            pl.BlockSpec((kp, nh), lambda i: (0, 0)),            # W1': resident
            pl.BlockSpec((1, nh), lambda i: (0, 0)),             # b1': resident
            pl.BlockSpec((nh, pack), lambda i: (0, 0)),          # V' : resident
            pl.BlockSpec(memory_space=pltpu.MemorySpace.SMEM),   # c  : scalar
        ],
        out_specs=pl.BlockSpec((tile_r, pack), lambda i: (i, 0)),
        compiler_params=pltpu.CompilerParams(
            dimension_semantics=("parallel",),       # shard batch grid over TCs (v7x)
            vmem_limit_bytes=32 * 1024 * 1024,       # safe on v5e/v6e/v7x
            allow_input_fusion=[True, False, False, False, False],  # fuse x convert
        ),
    )(x_packed, w1p, b1p, vp, c)

    # (num_tiles*tile_r, P) row-major flatten is exactly batch order.
    return out.reshape(-1)[:n].reshape(n, 1)


def _init_linear(key, fan_in, fan_out, dtype=jnp.float32):
    """PyTorch nn.Linear default init: U(-1/sqrt(fan_in), 1/sqrt(fan_in)).
    Weight stored pre-transposed as (fan_in, fan_out); bias as (1, fan_out)."""
    kw, kb = jax.random.split(key)
    bound = 1.0 / jnp.sqrt(jnp.asarray(fan_in, dtype))
    w = jax.random.uniform(kw, (fan_in, fan_out), dtype, minval=-bound, maxval=bound)
    b = jax.random.uniform(kb, (1, fan_out), dtype, minval=-bound, maxval=bound)
    return w, b


def init_params(key, in_features, hidden, latent):
    k1, k2, k3 = jax.random.split(key, 3)
    w1, b1 = _init_linear(k1, in_features, hidden)   # encoder[0]
    w2, b2 = _init_linear(k2, hidden, latent)        # encoder[-1] (out_features = latent)
    wf, bf = _init_linear(k3, latent, 1)             # self.fc = Linear(latent, 1)
    return (w1, b1, w2, b2, wf, bf)


def reference_forward(x, params):
    """Plain-JAX reference mirroring the (unfused) PyTorch forward."""
    w1, b1, w2, b2, wf, bf = params
    h = jnp.maximum(x @ w1 + b1, 0.0)
    z = h @ w2 + b2
    return jax.nn.sigmoid(z @ wf + bf)


if __name__ == "__main__":
    key = jax.random.PRNGKey(0)
    kx, kparam = jax.random.split(key)

    in_features, hidden, latent = 32, 16, 8
    params = init_params(kparam, in_features, hidden, latent)

    # --- case 1: tiny batch (one packed row, single grid step) ----------------
    x_small = jax.random.normal(kx, (8, in_features), jnp.float32)
    out_small = jax.block_until_ready(classifier_forward(x_small, params))
    ref_small = reference_forward(x_small, params)
    assert out_small.shape == (8, 1), out_small.shape
    assert jnp.allclose(out_small, ref_small, atol=1e-4, rtol=1e-4)

    # --- case 2: batch not a multiple of pack/tile (tail pad + OOB last block) -
    x_odd = jax.random.normal(kx, (300, in_features), jnp.float32)
    out_odd = jax.block_until_ready(classifier_forward(x_odd, params, tile_b=1024))
    ref_odd = reference_forward(x_odd, params)
    assert out_odd.shape == (300, 1), out_odd.shape
    assert jnp.allclose(out_odd, ref_odd, atol=1e-4, rtol=1e-4)

    # --- case 3: default config; grid>=4 heuristic sizes the tile -------------
    x_mid = jax.random.normal(kx, (4096, in_features), jnp.float32)
    out_mid = jax.block_until_ready(classifier_forward(x_mid, params))
    ref_mid = reference_forward(x_mid, params)
    assert out_mid.shape == (4096, 1), out_mid.shape
    assert jnp.allclose(out_mid, ref_mid, atol=1e-4, rtol=1e-4)

    # --- case 4: bf16 matmul operands (x convert fused into the pallas_call) --
    out_bf16 = jax.block_until_ready(
        classifier_forward(x_mid, params, compute_dtype=jnp.bfloat16))
    assert out_bf16.shape == (4096, 1), out_bf16.shape
    assert jnp.allclose(out_bf16, ref_mid, atol=3e-2, rtol=3e-2)

    print("KERNEL_OK")
</pallas_src>

<mosaic_0001>
module attributes {stable_mosaic.version = 11 : i64} {
  func.func @classifier_kernel(%arg0: i32, %arg1: memref<1x256xf32, #tpu.memory_space<vmem>>, %arg2: memref<256x128xf32, #tpu.memory_space<vmem>>, %arg3: memref<1x128xf32, #tpu.memory_space<vmem>>, %arg4: memref<128x8xf32, #tpu.memory_space<vmem>>, %arg5: memref<1x1xf32, #tpu.memory_space<smem>>, %arg6: memref<1x8xf32, #tpu.memory_space<vmem>>) attributes {dimension_semantics = [#tpu.dimension_semantics<parallel>], iteration_bounds = array<i64: 1>, scalar_prefetch = 0 : i64, scratch_operands = 0 : i64, tpu.core_type = #tpu.core_type<tc>, window_params = [{transform_indices = @transform_0, window_bounds = array<i64: 1, 256>}, {pipeline_mode = #tpu.pipeline_mode<synchronous>, transform_indices = @transform_1, window_bounds = array<i64: 256, 128>}, {pipeline_mode = #tpu.pipeline_mode<synchronous>, transform_indices = @transform_2, window_bounds = array<i64: 1, 128>}, {pipeline_mode = #tpu.pipeline_mode<synchronous>, transform_indices = @transform_3, window_bounds = array<i64: 128, 8>}, {transform_indices = @transform_4, window_bounds = array<i64: 1, 1>}, {transform_indices = @transform_5, window_bounds = array<i64: 1, 8>}]} {
    %c0 = arith.constant 0 : index
    %c0_0 = arith.constant 0 : index
    %0 = vector.load %arg1[%c0, %c0_0] : memref<1x256xf32, #tpu.memory_space<vmem>>, vector<1x256xf32>
    %c0_1 = arith.constant 0 : index
    %c0_2 = arith.constant 0 : index
    %1 = vector.load %arg2[%c0_1, %c0_2] : memref<256x128xf32, #tpu.memory_space<vmem>>, vector<256x128xf32>
    %cst = arith.constant dense<0.000000e+00> : vector<1x128xf32>
    %2 = tpu.matmul %0, %1, %cst {dimension_numbers = #tpu.dot_dimension_numbers<[1], [0], [0], [1], [0, 0, 1, 1], [], []>} : vector<1x256xf32>, vector<256x128xf32>, vector<1x128xf32> -> vector<1x128xf32>
    %c0_3 = arith.constant 0 : index
    %c0_4 = arith.constant 0 : index
    %3 = vector.load %arg3[%c0_3, %c0_4] : memref<1x128xf32, #tpu.memory_space<vmem>>, vector<1x128xf32>
    %4 = arith.addf %2, %3 : vector<1x128xf32>
    %cst_5 = arith.constant 0.000000e+00 : f32
    %5 = vector.broadcast %cst_5 : f32 to vector<1x128xf32>
    %6 = arith.maximumf %4, %5 : vector<1x128xf32>
    %c0_6 = arith.constant 0 : index
    %c0_7 = arith.constant 0 : index
    %7 = vector.load %arg4[%c0_6, %c0_7] : memref<128x8xf32, #tpu.memory_space<vmem>>, vector<128x8xf32>
    %cst_8 = arith.constant dense<0.000000e+00> : vector<1x8xf32>
    %8 = tpu.matmul %6, %7, %cst_8 {dimension_numbers = #tpu.dot_dimension_numbers<[1], [0], [0], [1], [0, 0, 1, 1], [], []>} : vector<1x128xf32>, vector<128x8xf32>, vector<1x8xf32> -> vector<1x8xf32>
    %c0_9 = arith.constant 0 : index
    %c0_10 = arith.constant 0 : index
    %9 = memref.load %arg5[%c0_9, %c0_10] : memref<1x1xf32, #tpu.memory_space<smem>>
    %10 = vector.broadcast %9 : f32 to vector<1x8xf32>
    %11 = arith.addf %8, %10 : vector<1x8xf32>
    %12 = arith.negf %11 : vector<1x8xf32>
    %13 = math.exp %12 : vector<1x8xf32>
    %cst_11 = arith.constant 1.000000e+00 : f32
    %14 = vector.broadcast %cst_11 : f32 to vector<1x8xf32>
    %15 = arith.addf %14, %13 : vector<1x8xf32>
    %16 = arith.divf %14, %15 : vector<1x8xf32>
    %c0_12 = arith.constant 0 : index
    %c0_13 = arith.constant 0 : index
    %17 = vector.load %arg6[%c0_12, %c0_13] : memref<1x8xf32, #tpu.memory_space<vmem>>, vector<1x8xf32>
    tpu.vector_store %arg6[%c0_12, %c0_13], %16 {strides = array<i32>} : memref<1x8xf32, #tpu.memory_space<vmem>>, vector<1x8xf32>,
    return
  }
  func.func @transform_0(%arg0: i32) -> (i32, i32) {
    %c0_i32 = arith.constant 0 : i32
    %c0_i32_0 = arith.constant 0 : i32
    return %arg0, %c0_i32 : i32, i32
  }
  func.func @transform_1(%arg0: i32) -> (i32, i32) {
    %c0_i32 = arith.constant 0 : i32
    %c0_i32_0 = arith.constant 0 : i32
    %c0_i32_1 = arith.constant 0 : i32
    return %c0_i32, %c0_i32_0 : i32, i32
  }
  func.func @transform_2(%arg0: i32) -> (i32, i32) {
    %c0_i32 = arith.constant 0 : i32
    %c0_i32_0 = arith.constant 0 : i32
    %c0_i32_1 = arith.constant 0 : i32
    return %c0_i32, %c0_i32_0 : i32, i32
  }
  func.func @transform_3(%arg0: i32) -> (i32, i32) {
    %c0_i32 = arith.constant 0 : i32
    %c0_i32_0 = arith.constant 0 : i32
    %c0_i32_1 = arith.constant 0 : i32
    return %c0_i32, %c0_i32_0 : i32, i32
  }
  func.func @transform_4(%arg0: i32) -> (i32, i32) {
    %c0_i32 = arith.constant 0 : i32
    %c0_i32_0 = arith.constant 0 : i32
    %c0_i32_1 = arith.constant 0 : i32
    return %c0_i32, %c0_i32_0 : i32, i32
  }
  func.func @transform_5(%arg0: i32) -> (i32, i32) {
    %c0_i32 = arith.constant 0 : i32
    %c0_i32_0 = arith.constant 0 : i32
    return %arg0, %c0_i32 : i32, i32
  }
}

</mosaic_0001>

<llo_original>
// kernel: tpu_custom_call.1
$region0: #{tpu_custom_call.1}
  #allocation0 [shape = 'u32[]', space=smem, size = 0x4, offset = 0x4, fixed_abs, tag = 'smem constant byte address 0x4 - core index']
  #allocation1 [shape = 'u32[144,128]{1,0:T(1,128)}', space=vmem, size = 0x12000, scoped, tag = 'internal scratch']
  #allocation2 [shape = 'f32[1,1]{1,0:T(1,128)S(6)}', space=smem, size = 0x200, scoped, tag = 'scoped memory for tpu_custom_call.1']
  %s0 = inlined_call_operand.vmem [shape: f32[1,256], index: 0, kind: input, shape index: {}]
  %s1 = inlined_call_operand.hbm [shape: f32[256,128], index: 1, kind: input, shape index: {}]
  %s2 = inlined_call_operand.vmem [shape: f32[1,128], index: 2, kind: input, shape index: {}]
  %s3 = inlined_call_operand.vmem [shape: f32[128,8], index: 3, kind: input, shape index: {}]
  %s4 = inlined_call_operand.<no memory space> [shape: f32[1,1], index: 4, kind: input, shape index: {}]
  %s5 = inlined_call_operand.hbm [shape: f32[1,8], index: 5, kind: output, shape index: {}]
  %s6 = sld [smem:[#allocation0]]
  $region34: #{tpu_custom_call.1} parent=0
    _
  %s8 = ssub.s32 1, %s6
  %s9 = scalar_select 0, %s8, %s6
  %10 = sst [smem:[#allocation2]] %s4
  $region1: #{tpu_custom_call.1} parent=0
    #allocation3 [shape = 'u8[131072]{0}', space=vmem, size = 0x20000, scoped, tag = 'input window, operand 1, single buffered']
    #allocation4 [shape = 's32[1]{0}', space=sflag, size = 0x4, scoped, tag = 'scoped memory for tpu_custom_call.1']
    #allocation5 [shape = 's32[1]{0}', space=sflag, size = 0x4, scoped, tag = 'scoped memory for tpu_custom_call.1']
    #allocation6 [shape = 'u8[512]{0}', space=vmem, size = 0x400, scoped, tag = 'output window, operand 0, single buffered']
    %11 = vsyncpa [#allocation4], 0
    %12 = vsyncpa [#allocation5], 0
    // Predicated region
    $region2: #{tpu_custom_call.1} parent=1 // pred_check
      _
    $region3: #{tpu_custom_call.1} parent=1 // pred_check_branch
      %14 = sbr.rel (0) target = $region5
    $region4: #{tpu_custom_call.1} parent=1 // pred_region
      _
    $region5: #{tpu_custom_call.1} parent=1 // pred_fallthru
      _
    // Predicated region
    $region6: #{tpu_custom_call.1} parent=1 // pred_check
      _
    $region7: #{tpu_custom_call.1} parent=1 // pred_check_branch
      %16 = sbr.rel (0) target = $region9
    $region8: #{tpu_custom_call.1} parent=1 // pred_region
      %s18 = ssub.s32 4096, 4096
      %19 = vsyncadd [#allocation4], %s18
      %s20 = sshll.u32 [#allocation3], 4
      %s21 = int_to_ptr.vmem [resolvable:$true] %s20
      %26 = dma.hbm_to_vmem [thread:$0]  %s1, 4096, %s21, [#allocation4], 128, 128, 8
    $region9: #{tpu_custom_call.1} parent=1 // pred_fallthru
      _
    // Predicated region
    $region10: #{tpu_custom_call.1} parent=1 // pred_check
      _
    $region11: #{tpu_custom_call.1} parent=1 // pred_check_branch
      %28 = sbr.rel (0) target = $region13
    $region12: #{tpu_custom_call.1} parent=1 // pred_region
      _
    $region13: #{tpu_custom_call.1} parent=1 // pred_fallthru
      _
    // Predicated region
    $region14: #{tpu_custom_call.1} parent=1 // pred_check
      _
    $region15: #{tpu_custom_call.1} parent=1 // pred_check_branch
      %30 = sbr.rel (0) target = $region17
    $region16: #{tpu_custom_call.1} parent=1 // pred_region
      _
    $region17: #{tpu_custom_call.1} parent=1 // pred_fallthru
      _
    // Predicated region
    $region18: #{tpu_custom_call.1} parent=1 // pred_check
      _
    $region19: #{tpu_custom_call.1} parent=1 // pred_check_branch
      %32 = sbr.rel (0) target = $region21
    $region20: #{tpu_custom_call.1} parent=1 // pred_region
      _
    $region21: #{tpu_custom_call.1} parent=1 // pred_fallthru
      _
    // Predicated region
    $region22: #{tpu_custom_call.1} parent=1 // pred_check
      _
    $region23: #{tpu_custom_call.1} parent=1 // pred_check_branch
      %34 = sbr.rel (0) target = $region25
    $region24: #{tpu_custom_call.1} parent=1 // pred_region
      %35 = dma.done [#allocation4], 4096
    $region25: #{tpu_custom_call.1} parent=1 // pred_fallthru
      _
    %v36 = vld [vmem:[%s0] sm:$0x3]
    %v37 = vld [vmem:[#allocation3] sm:$0xff]
    %v38 = vld [vmem:[#allocation3 + $0x8] sm:$0xff]
    %v39 = vld [vmem:[#allocation3 + $0x10] sm:$0xff]
    %v40 = vld [vmem:[#allocation3 + $0x18] sm:$0xff]
    %v41 = vld [vmem:[#allocation3 + $0x20] sm:$0xff]
    %v42 = vld [vmem:[#allocation3 + $0x28] sm:$0xff]
    %v43 = vld [vmem:[#allocation3 + $0x30] sm:$0xff]
    %v44 = vld [vmem:[#allocation3 + $0x38] sm:$0xff]
    %v45 = vld [vmem:[#allocation3 + $0x40] sm:$0xff]
    %v46 = vld [vmem:[#allocation3 + $0x48] sm:$0xff]
    %v47 = vld [vmem:[#allocation3 + $0x50] sm:$0xff]
    %v48 = vld [vmem:[#allocation3 + $0x58] sm:$0xff]
    %v49 = vld [vmem:[#allocation3 + $0x60] sm:$0xff]
    %v50 = vld [vmem:[#allocation3 + $0x68] sm:$0xff]
    %v51 = vld [vmem:[#allocation3 + $0x70] sm:$0xff]
    %v52 = vld [vmem:[#allocation3 + $0x78] sm:$0xff]
    %v53 = vld [vmem:[#allocation3 + $0x80] sm:$0xff]
    %v54 = vld [vmem:[#allocation3 + $0x88] sm:$0xff]
    %v55 = vld [vmem:[#allocation3 + $0x90] sm:$0xff]
    %v56 = vld [vmem:[#allocation3 + $0x98] sm:$0xff]
    %v57 = vld [vmem:[#allocation3 + $0xa0] sm:$0xff]
    %v58 = vld [vmem:[#allocation3 + $0xa8] sm:$0xff]
    %v59 = vld [vmem:[#allocation3 + $0xb0] sm:$0xff]
    %v60 = vld [vmem:[#allocation3 + $0xb8] sm:$0xff]
    %v61 = vld [vmem:[#allocation3 + $0xc0] sm:$0xff]
    %v62 = vld [vmem:[#allocation3 + $0xc8] sm:$0xff]
    %v63 = vld [vmem:[#allocation3 + $0xd0] sm:$0xff]
    %v64 = vld [vmem:[#allocation3 + $0xd8] sm:$0xff]
    %v65 = vld [vmem:[#allocation3 + $0xe0] sm:$0xff]
    %v66 = vld [vmem:[#allocation3 + $0xe8] sm:$0xff]
    %v67 = vld [vmem:[#allocation3 + $0xf0] sm:$0xff]
    %v68 = vld [vmem:[#allocation3 + $0xf8] sm:$0xff]
    %v69 = vld [vmem:[%s2] sm:$0x1]
    %v71 = vlaneseq
    %v72 = vshrl.u32 %v71, 7
    %v73 = vsub.s32 0, %v72
    %v74 = vrot.slane %v36, %v73
    %v75 = vlaneseq
    %v76 = vshrl.u32 %v75, 7
    %v77 = vsub.s32 1, %v76
    %v78 = vrot.slane %v36, %v77
    %81 = vmatprep.subr.mxu0 0.0
    %82 = vmatpush1.msra.mxu0 %v37
    %83 = vmatprep.subr.mxu0 0.0
    %84 = vmatpush1.msra.mxu0 %v38
    %85 = vmatprep.subr.mxu0 0.0
    %86 = vmatpush1.msra.mxu0 %v39
    %87 = vmatprep.subr.mxu0 0.0
    %88 = vmatpush1.msra.mxu0 %v40
    %89 = vmatprep.subr.mxu0 0.0
    %90 = vmatpush1.msra.mxu0 %v41
    %91 = vmatprep.subr.mxu0 0.0
    %92 = vmatpush1.msra.mxu0 %v42
    %93 = vmatprep.subr.mxu0 0.0
    %94 = vmatpush1.msra.mxu0 %v43
    %95 = vmatprep.subr.mxu0 0.0
    %96 = vmatpush1.msra.mxu0 %v44
    %97 = vmatprep.subr.mxu0 0.0
    %98 = vmatpush1.msra.mxu0 %v45
    %99 = vmatprep.subr.mxu0 0.0
    %100 = vmatpush1.msra.mxu0 %v46
    %101 = vmatprep.subr.mxu0 0.0
    %102 = vmatpush1.msra.mxu0 %v47
    %103 = vmatprep.subr.mxu0 0.0
    %104 = vmatpush1.msra.mxu0 %v48
    %105 = vmatprep.subr.mxu0 0.0
    %106 = vmatpush1.msra.mxu0 %v49
    %107 = vmatprep.subr.mxu0 0.0
    %108 = vmatpush1.msra.mxu0 %v50
    %109 = vmatprep.subr.mxu0 0.0
    %110 = vmatpush1.msra.mxu0 %v51
    %111 = vmatprep.subr.mxu0 0.0
    %112 = vmatpush1.msra.mxu0 %v52
    %113 = vmatprep.subr.mxu0 0.0
    %114 = vmatpush1.msra.mxu0 %v53
    %115 = vmatprep.subr.mxu0 0.0
    %116 = vmatpush1.msra.mxu0 %v54
    %117 = vmatprep.subr.mxu0 0.0
    %118 = vmatpush1.msra.mxu0 %v55
    %119 = vmatprep.subr.mxu0 0.0
    %120 = vmatpush1.msra.mxu0 %v56
    %121 = vmatprep.subr.mxu0 0.0
    %122 = vmatpush1.msra.mxu0 %v57
    %123 = vmatprep.subr.mxu0 0.0
    %124 = vmatpush1.msra.mxu0 %v58
    %125 = vmatprep.subr.mxu0 0.0
    %126 = vmatpush1.msra.mxu0 %v59
    %127 = vmatprep.subr.mxu0 0.0
    %128 = vmatpush1.msra.mxu0 %v60
    %129 = vmatprep.subr.mxu0 0.0
    %130 = vmatpush1.msra.mxu0 %v61
    %131 = vmatprep.subr.mxu0 0.0
    %132 = vmatpush1.msra.mxu0 %v62
    %133 = vmatprep.subr.mxu0 0.0
    %134 = vmatpush1.msra.mxu0 %v63
    %135 = vmatprep.subr.mxu0 0.0
    %136 = vmatpush1.msra.mxu0 %v64
    %137 = vmatprep.subr.mxu0 0.0
    %138 = vmatpush1.msra.mxu0 %v65
    %139 = vmatprep.subr.mxu0 0.0
    %140 = vmatpush1.msra.mxu0 %v66
    %141 = vmatprep.subr.mxu0 0.0
    %142 = vmatpush1.msra.mxu0 %v67
    %143 = vmatprep.subr.mxu0 0.0
    %144 = vmatpush1.msra.mxu0 %v68
    %145 = vmatprep.mubr.f32.mxu0 %v78
    %146 = vmatmul.mubr.f32.gmra.mrb[0].mxu0 %v74
    %v147 = vpop.f32.mrb[0].mxu0
    %v148 = vadd.f32 %v69, %v147
    %v149 = vpop.f32.mrb[0].mxu0
    %150 = vdwg.mxu0
    %v151 = vmax.f32 %v148, 0.0
    %v152 = vld [vmem:[%s3] sm:$0xff]
    %v153 = vld [vmem:[%s3 + $0x8] sm:$0xff]
    %v154 = vld [vmem:[%s3 + $0x10] sm:$0xff]
    %v155 = vld [vmem:[%s3 + $0x18] sm:$0xff]
    %v156 = vld [vmem:[%s3 + $0x20] sm:$0xff]
    %v157 = vld [vmem:[%s3 + $0x28] sm:$0xff]
    %v158 = vld [vmem:[%s3 + $0x30] sm:$0xff]
    %v159 = vld [vmem:[%s3 + $0x38] sm:$0xff]
    %v160 = vld [vmem:[%s3 + $0x40] sm:$0xff]
    %v161 = vld [vmem:[%s3 + $0x48] sm:$0xff]
    %v162 = vld [vmem:[%s3 + $0x50] sm:$0xff]
    %v163 = vld [vmem:[%s3 + $0x58] sm:$0xff]
    %v164 = vld [vmem:[%s3 + $0x60] sm:$0xff]
    %v165 = vld [vmem:[%s3 + $0x68] sm:$0xff]
    %v166 = vld [vmem:[%s3 + $0x70] sm:$0xff]
    %v167 = vld [vmem:[%s3 + $0x78] sm:$0xff]
    %s168 = sld [smem:[#allocation2]]
    %v169 = vstv %s168
    %170 = vmatprep.subr.mxu0 0.0
    %171 = vmatpush1.msra.mxu0 %v152
    %172 = vmatprep.subr.mxu0 0.0
    %173 = vmatpush1.msra.mxu0 %v153
    %174 = vmatprep.subr.mxu0 0.0
    %175 = vmatpush1.msra.mxu0 %v154
    %176 = vmatprep.subr.mxu0 0.0
    %177 = vmatpush1.msra.mxu0 %v155
    %178 = vmatprep.subr.mxu0 0.0
    %179 = vmatpush1.msra.mxu0 %v156
    %180 = vmatprep.subr.mxu0 0.0
    %181 = vmatpush1.msra.mxu0 %v157
    %182 = vmatprep.subr.mxu0 0.0
    %183 = vmatpush1.msra.mxu0 %v158
    %184 = vmatprep.subr.mxu0 0.0
    %185 = vmatpush1.msra.mxu0 %v159
    %186 = vmatprep.subr.mxu0 0.0
    %187 = vmatpush1.msra.mxu0 %v160
    %188 = vmatprep.subr.mxu0 0.0
    %189 = vmatpush1.msra.mxu0 %v161
    %190 = vmatprep.subr.mxu0 0.0
    %191 = vmatpush1.msra.mxu0 %v162
    %192 = vmatprep.subr.mxu0 0.0
    %193 = vmatpush1.msra.mxu0 %v163
    %194 = vmatprep.subr.mxu0 0.0
    %195 = vmatpush1.msra.mxu0 %v164
    %196 = vmatprep.subr.mxu0 0.0
    %197 = vmatpush1.msra.mxu0 %v165
    %198 = vmatprep.subr.mxu0 0.0
    %199 = vmatpush1.msra.mxu0 %v166
    %200 = vmatprep.subr.mxu0 0.0
    %201 = vmatpush1.msra.mxu0 %v167
    %202 = vmatprep.subr.mxu0 0.0
    %203 = vmatpush1.msra.mxu0 0.0
    %204 = vmatprep.subr.mxu0 0.0
    %205 = vmatpush1.msra.mxu0 0.0
    %206 = vmatprep.subr.mxu0 0.0
    %207 = vmatpush1.msra.mxu0 0.0
    %208 = vmatprep.subr.mxu0 0.0
    %209 = vmatpush1.msra.mxu0 0.0
    %210 = vmatprep.subr.mxu0 0.0
    %211 = vmatpush1.msra.mxu0 0.0
    %212 = vmatprep.subr.mxu0 0.0
    %213 = vmatpush1.msra.mxu0 0.0
    %214 = vmatprep.subr.mxu0 0.0
    %215 = vmatpush1.msra.mxu0 0.0
    %216 = vmatprep.subr.mxu0 0.0
    %217 = vmatpush1.msra.mxu0 0.0
    %218 = vmatprep.subr.mxu0 0.0
    %219 = vmatpush1.msra.mxu0 0.0
    %220 = vmatprep.subr.mxu0 0.0
    %221 = vmatpush1.msra.mxu0 0.0
    %222 = vmatprep.subr.mxu0 0.0
    %223 = vmatpush1.msra.mxu0 0.0
    %224 = vmatprep.subr.mxu0 0.0
    %225 = vmatpush1.msra.mxu0 0.0
    %226 = vmatprep.subr.mxu0 0.0
    %227 = vmatpush1.msra.mxu0 0.0
    %228 = vmatprep.subr.mxu0 0.0
    %229 = vmatpush1.msra.mxu0 0.0
    %230 = vmatprep.subr.mxu0 0.0
    %231 = vmatpush1.msra.mxu0 0.0
    %232 = vmatprep.subr.mxu0 0.0
    %233 = vmatpush1.msra.mxu0 0.0
    %234 = vmatprep.mubr.f32.mxu0 0.0
    %235 = vmatmul.mubr.f32.gmra.mrb[0].mxu0 %v151
    %v236 = vpop.f32.mrb[0].mxu0
    %v237 = vadd.f32 %v169, %v236
    %v238 = vpop.f32.mrb[0].mxu0
    %239 = vdwg.mxu0
    %v240 = vxor.u32 %v237, 2147483648
    %v241 = vmul.f32 %v240, 1.442695
    %v242 = vpow.pop %v241
    %v243 = vadd.f32 %v242, 1.0
    %v244 = vrcp.pop %v243
    %v245 = vmul.f32 1.0, %v244
    %vm246 = vcmask 57344
    %247 = vst.msk [vmem:[#allocation6] sm:$0x1] %vm246, %v245
    // Predicated region
    $region26: #{tpu_custom_call.1} parent=1 // pred_check
      _
    $region27: #{tpu_custom_call.1} parent=1 // pred_check_branch
      %249 = sbr.rel (0) target = $region29
    $region28: #{tpu_custom_call.1} parent=1 // pred_region
      %s251 = ssub.s32 16, 16
      %252 = vsyncadd [#allocation5], %s251
      %s254 = sshll.u32 [#allocation6], 4
      %s255 = int_to_ptr.vmem [resolvable:$true] %s254
      %257 = dma.vmem_to_hbm [thread:$0]  %s255, 16, %s5, [#allocation5]
    $region29: #{tpu_custom_call.1} parent=1 // pred_fallthru
      _
    // Predicated region
    $region30: #{tpu_custom_call.1} parent=1 // pred_check
      _
    $region31: #{tpu_custom_call.1} parent=1 // pred_check_branch
      %259 = sbr.rel (0) target = $region33
    $region32: #{tpu_custom_call.1} parent=1 // pred_region
      %260 = dma.done [#allocation5], 16
    $region33: #{tpu_custom_call.1} parent=1 // pred_fallthru
      _
    %261 = vsyncpa [#allocation4], 1
    %262 = vsyncpa [#allocation5], 1

</llo_original>
